<compile_context>
chip_gen: v7x
topology: tpu7x:2x2x1
jax: 0.10.0
libtpu: 0.0.40
codegen_flags: <defaults>
</compile_context>

<pallas_src>
import functools

import jax
import jax.numpy as jnp
from jax import lax
from jax.experimental import pallas as pl
from jax.experimental.pallas import tpu as pltpu


# -----------------------------------------------------------------------------
# Helpers
# -----------------------------------------------------------------------------
def _round_up(n, m):
    return (n + m - 1) // m * m


def _pad_last(x, new_last, dtype):
    """Zero-pad the last axis of x to `new_last` and cast to `dtype`."""
    x = x.astype(dtype)
    pad = new_last - x.shape[-1]
    if pad == 0:
        return x
    widths = [(0, 0)] * (x.ndim - 1) + [(0, pad)]
    return jnp.pad(x, widths)


def _pick_chunk(T, max_chunk=8):
    """Largest divisor of T that is <= max_chunk (timestep chunking)."""
    for c in range(min(T, max_chunk), 0, -1):
        if T % c == 0:
            return c
    return 1


def _vmem_physical_bytes():
    try:
        return int(pltpu.get_tpu_info().vmem_capacity_bytes)
    except Exception:
        return 64 * 1024 * 1024  # assume the smallest per-TC VMEM (v7x)


def _compiler_params(vmem_bytes_needed, dimension_semantics=None):
    kwargs = {}
    if dimension_semantics is not None:
        kwargs["dimension_semantics"] = dimension_semantics
    # Only raise the scoped-VMEM limit when the blocks could overflow the
    # smallest default (16 MiB on v5e); cap generation-aware (~5/8 of physical)
    # so compiler-internal scratch keeps headroom on v7x's 64 MiB.
    if vmem_bytes_needed > 12 * 1024 * 1024:
        cap = max(16 * 1024 * 1024, _vmem_physical_bytes() * 5 // 8)
        kwargs["vmem_limit_bytes"] = min(int(vmem_bytes_needed * 3 // 2), cap)
    return pltpu.CompilerParams(**kwargs)


# -----------------------------------------------------------------------------
# Parameter preparation (one time, hoisted out of the per-step path)
# -----------------------------------------------------------------------------
def prepare_params(weight, bias, weight_h, bias_h, *, compute_dtype=jnp.bfloat16):
    """Transpose PyTorch (out,in) Linears to (in,out), pad to 128 lanes,
    keep Wx and Wh SEPARATE (x-projection is hoisted out of the recurrence),
    and fold the two biases into a single (1, hid_pad) f32 vector."""
    hidden_dim, input_dim = weight.shape
    in_pad = _round_up(input_dim, 128)
    hid_pad = _round_up(hidden_dim, 128)

    wx = jnp.zeros((in_pad, hid_pad), dtype=compute_dtype)
    wx = wx.at[:input_dim, :hidden_dim].set(weight.T.astype(compute_dtype))

    wh = jnp.zeros((hid_pad, hid_pad), dtype=compute_dtype)
    wh = wh.at[:hidden_dim, :hidden_dim].set(weight_h.T.astype(compute_dtype))

    b = jnp.zeros((1, hid_pad), dtype=jnp.float32)
    b = b.at[0, :hidden_dim].set((bias + bias_h).astype(jnp.float32))

    return {
        "wx": wx,
        "wh": wh,
        "b": b,
        "input_dim": int(input_dim),
        "hidden_dim": int(hidden_dim),
        "in_pad": in_pad,
        "hid_pad": hid_pad,
        "compute_dtype": compute_dtype,
    }


def pad_hidden(h, params):
    """Pad an (B, hidden_dim) hidden state to (B, hid_pad) f32 (pad cols zero)."""
    return _pad_last(h, params["hid_pad"], jnp.float32)


# -----------------------------------------------------------------------------
# Kernels
# -----------------------------------------------------------------------------
def rnncell_step_kernel(x_ref, h_ref, wx_ref, wh_ref, b_ref, y_ref):
    """Single step: two MXU dots with f32 accumulation + folded bias + tanh."""
    acc = jnp.dot(x_ref[...], wx_ref[...], preferred_element_type=jnp.float32)
    acc = acc + jnp.dot(h_ref[...], wh_ref[...],
                        preferred_element_type=jnp.float32)
    y_ref[...] = jnp.tanh(acc + b_ref[...]).astype(y_ref.dtype)


def xproj_kernel(x_ref, wx_ref, b_ref, o_ref):
    """Batched-over-time input projection: xproj = x @ Wx + (bias + bias_h)."""
    acc = jnp.dot(x_ref[...], wx_ref[...], preferred_element_type=jnp.float32)
    o_ref[...] = acc + b_ref[...]


def recurrence_kernel(h0_ref, xp_ref, wh_ref, y_ref, h_scratch, *, chunk):
    """`chunk` timesteps of the recurrence  y_t = tanh(xproj_t + h_{t-1} @ Wh).

    h_scratch is an f32 VMEM scratch that carries the hidden state across grid
    iterations (never touches HBM); it is cast to the compute dtype only as the
    MXU operand, so bf16 rounding does not compound across timesteps.
    """
    @pl.when(pl.program_id(0) == 0)
    def _():
        h_scratch[...] = h0_ref[...]

    def step(i, h):
        acc = jnp.dot(h.astype(wh_ref.dtype), wh_ref[...],
                      preferred_element_type=jnp.float32)
        y = jnp.tanh(xp_ref[i] + acc)
        y_ref[i] = y.astype(y_ref.dtype)
        return y

    h_scratch[...] = lax.fori_loop(0, chunk, step, h_scratch[...], unroll=True)


# -----------------------------------------------------------------------------
# Wrappers
# -----------------------------------------------------------------------------
def rnncell_step(x, h_pad, params):
    """One RNNCell forward step (functional equivalent of module.forward).

    x:     (B, input_dim) float32
    h_pad: (B, hid_pad)   float32 padded hidden state (pad columns zero)
    Returns the padded new hidden state (B, hid_pad) f32; slice [:, :hidden_dim]
    for the user-visible y.
    """
    B = x.shape[0]
    in_pad, hid_pad = params["in_pad"], params["hid_pad"]
    cdt = params["compute_dtype"]
    itm = jnp.dtype(cdt).itemsize

    x_pad = _pad_last(x, in_pad, cdt)
    h_c = h_pad.astype(cdt)

    block_bytes = (B * in_pad * itm + B * hid_pad * itm
                   + in_pad * hid_pad * itm + hid_pad * hid_pad * itm
                   + hid_pad * 4 + B * hid_pad * 4)
    cost = pl.CostEstimate(
        flops=2 * B * (in_pad + hid_pad) * hid_pad,
        transcendentals=B * hid_pad,
        bytes_accessed=block_bytes,
    )

    return pl.pallas_call(
        rnncell_step_kernel,
        out_shape=jax.ShapeDtypeStruct((B, hid_pad), jnp.float32),
        in_specs=[
            pl.BlockSpec((B, in_pad), lambda: (0, 0)),
            pl.BlockSpec((B, hid_pad), lambda: (0, 0)),
            pl.BlockSpec((in_pad, hid_pad), lambda: (0, 0)),
            pl.BlockSpec((hid_pad, hid_pad), lambda: (0, 0)),
            pl.BlockSpec((1, hid_pad), lambda: (0, 0)),
        ],
        out_specs=pl.BlockSpec((B, hid_pad), lambda: (0, 0)),
        cost_estimate=cost,
        compiler_params=_compiler_params(2 * block_bytes),
    )(x_pad, h_c, params["wx"], params["wh"], params["b"])


def _input_projection(xs, params):
    """xproj[t] = x_t @ Wx + (bias + bias_h) for ALL timesteps in one big matmul
    (M = T*B rows -> near-full MXU occupancy). Returns (T, B, hid_pad) f32."""
    T, B, _ = xs.shape
    in_pad, hid_pad = params["in_pad"], params["hid_pad"]
    cdt = params["compute_dtype"]
    itm = jnp.dtype(cdt).itemsize

    M = T * B
    x2 = _pad_last(xs.reshape(M, xs.shape[-1]), in_pad, cdt)
    tm = min(256, _round_up(M, 8))
    M_pad = _round_up(M, tm)
    if M_pad != M:
        x2 = jnp.pad(x2, ((0, M_pad - M), (0, 0)))

    block_bytes = (tm * in_pad * itm + in_pad * hid_pad * itm
                   + hid_pad * 4 + tm * hid_pad * 4)
    cost = pl.CostEstimate(
        flops=2 * M_pad * in_pad * hid_pad,
        transcendentals=0,
        bytes_accessed=(M_pad * in_pad * itm + in_pad * hid_pad * itm
                        + hid_pad * 4 + M_pad * hid_pad * 4),
    )

    out = pl.pallas_call(
        xproj_kernel,
        out_shape=jax.ShapeDtypeStruct((M_pad, hid_pad), jnp.float32),
        grid_spec=pltpu.PrefetchScalarGridSpec(
            num_scalar_prefetch=0,
            grid=(M_pad // tm,),
            in_specs=[
                pl.BlockSpec((tm, in_pad), lambda i: (i, 0)),
                # Resident, constant-index weight: single-buffered.
                pl.BlockSpec((in_pad, hid_pad), lambda i: (0, 0),
                             pipeline_mode=pl.Buffered(1)),
                pl.BlockSpec((1, hid_pad), lambda i: (0, 0),
                             pipeline_mode=pl.Buffered(1)),
            ],
            out_specs=pl.BlockSpec((tm, hid_pad), lambda i: (i, 0)),
        ),
        cost_estimate=cost,
        compiler_params=_compiler_params(2 * block_bytes,
                                         dimension_semantics=("parallel",)),
    )(x2, params["wx"], params["b"])
    return out[:M].reshape(T, B, hid_pad)


def rnncell_forward_seq(xs, h0_pad, params, *, out_dtype=jnp.float32, chunk=None):
    """Run the RNNCell over a whole sequence.

    xs:     (T, B, input_dim) float32
    h0_pad: (B, hid_pad)      float32 padded initial hidden state
    Returns ys_pad: (T, B, hid_pad) `out_dtype` (ys_pad[-1] = final hidden state).

    Stage 1: one large matmul for the input projection (all T at once).
    Stage 2: chunked recurrence; Wh stays resident in VMEM (single-buffered,
             constant index_map) and the hidden state is carried in f32 scratch.
    """
    T, B, _ = xs.shape
    hid_pad = params["hid_pad"]
    cdt = params["compute_dtype"]
    itm_w = jnp.dtype(cdt).itemsize
    itm_o = jnp.dtype(out_dtype).itemsize

    xproj = _input_projection(xs, params)          # (T, B, hid_pad) f32
    if chunk is None:
        chunk = _pick_chunk(T)
    n_chunks = T // chunk

    kernel = functools.partial(recurrence_kernel, chunk=chunk)

    block_bytes = (B * hid_pad * 4                 # h0
                   + chunk * B * hid_pad * 4       # xproj block
                   + hid_pad * hid_pad * itm_w     # Wh (resident)
                   + chunk * B * hid_pad * itm_o   # y block
                   + B * hid_pad * 4)              # h scratch
    cost = pl.CostEstimate(
        flops=2 * T * B * hid_pad * hid_pad,
        transcendentals=T * B * hid_pad,
        bytes_accessed=(B * hid_pad * 4 + T * B * hid_pad * 4
                        + hid_pad * hid_pad * itm_w + T * B * hid_pad * itm_o),
    )

    return pl.pallas_call(
        kernel,
        out_shape=jax.ShapeDtypeStruct((T, B, hid_pad), out_dtype),
        grid_spec=pltpu.PrefetchScalarGridSpec(
            num_scalar_prefetch=0,
            grid=(n_chunks,),
            in_specs=[
                pl.BlockSpec((B, hid_pad), lambda t: (0, 0),
                             pipeline_mode=pl.Buffered(1)),       # h0 (t==0 only)
                pl.BlockSpec((chunk, B, hid_pad), lambda t: (t, 0, 0)),  # xproj
                pl.BlockSpec((hid_pad, hid_pad), lambda t: (0, 0),
                             pipeline_mode=pl.Buffered(1)),       # Wh resident
            ],
            out_specs=pl.BlockSpec((chunk, B, hid_pad), lambda t: (t, 0, 0)),
            scratch_shapes=[pltpu.VMEM((B, hid_pad), jnp.float32)],
        ),
        cost_estimate=cost,
        # Sequential recurrence through the scratch carry -> "arbitrary".
        compiler_params=_compiler_params(2 * block_bytes,
                                         dimension_semantics=("arbitrary",)),
    )(h0_pad.astype(jnp.float32), xproj, params["wh"])


# -----------------------------------------------------------------------------
# Self-test
# -----------------------------------------------------------------------------
if __name__ == "__main__":
    # Small shapes (the original module uses 1225x1225; we scale down).
    batch, input_dim, hidden_dim, seq_len = 8, 16, 32, 4
    key = jax.random.PRNGKey(0)
    k1, k2, k3, k4, k5, k6, k7 = jax.random.split(key, 7)

    # nn.Linear(input_dim, hidden_dim): weight (hid, in), bias (hid,)
    lim_w = 1.0 / (input_dim ** 0.5)
    weight = jax.random.uniform(k1, (hidden_dim, input_dim), jnp.float32, -lim_w, lim_w)
    bias = jax.random.uniform(k2, (hidden_dim,), jnp.float32, -lim_w, lim_w)
    lim_h = 1.0 / (hidden_dim ** 0.5)
    weight_h = jax.random.uniform(k3, (hidden_dim, hidden_dim), jnp.float32, -lim_h, lim_h)
    bias_h = jax.random.uniform(k4, (hidden_dim,), jnp.float32, -lim_h, lim_h)
    # NOTE: self.out Linear exists in the module __init__ but is unused in forward().

    # hidden_state = F.normalize(randn(shape))  (L2-normalize each row)
    h0 = jax.random.normal(k5, (batch, hidden_dim), jnp.float32)
    h0 = h0 / jnp.maximum(jnp.linalg.norm(h0, axis=1, keepdims=True), 1e-12)

    x = jax.random.normal(k6, (batch, input_dim), jnp.float32)
    xs = jax.random.normal(k7, (seq_len, batch, input_dim), jnp.float32)

    # Pure-JAX references.
    y_ref = jnp.tanh(x @ weight.T + bias + h0 @ weight_h.T + bias_h)

    def ref_step(h, xt):
        yt = jnp.tanh(xt @ weight.T + bias + h @ weight_h.T + bias_h)
        return yt, yt

    _, ys_ref = jax.lax.scan(ref_step, h0, xs)

    # ---- single step, f32 compute (exact check) -------------------------------
    params_f32 = prepare_params(weight, bias, weight_h, bias_h,
                                compute_dtype=jnp.float32)
    h0_pad = pad_hidden(h0, params_f32)
    y_pad = jax.block_until_ready(rnncell_step(x, h0_pad, params_f32))
    y = y_pad[:, :hidden_dim]
    assert jnp.allclose(y, y_ref, atol=1e-5, rtol=1e-5), "f32 step mismatch"
    # Padded hidden columns must stay exactly zero so the state can be carried padded.
    assert jnp.all(y_pad[:, hidden_dim:] == 0.0), "padding columns not preserved"

    # ---- single step, bf16 weights/activations (f32 MXU accumulation) ---------
    params_bf16 = prepare_params(weight, bias, weight_h, bias_h,
                                 compute_dtype=jnp.bfloat16)
    y16 = jax.block_until_ready(rnncell_step(x, h0_pad, params_bf16))[:, :hidden_dim]
    assert jnp.allclose(y16, y_ref, atol=2e-2, rtol=2e-2), "bf16 step mismatch"

    # ---- full sequence, f32 compute (exact check) ------------------------------
    ys_pad = jax.block_until_ready(rnncell_forward_seq(xs, h0_pad, params_f32))
    ys = ys_pad[:, :, :hidden_dim]
    assert jnp.allclose(ys, ys_ref, atol=1e-5, rtol=1e-5), "f32 sequence mismatch"
    assert jnp.all(ys_pad[:, :, hidden_dim:] == 0.0), "seq padding columns not preserved"

    # ---- full sequence, bf16 weights, f32-carried hidden state ----------------
    ys16_pad = jax.block_until_ready(rnncell_forward_seq(xs, h0_pad, params_bf16))
    ys16 = ys16_pad[:, :, :hidden_dim]
    assert jnp.allclose(ys16, ys_ref, atol=2e-2, rtol=2e-2), "bf16 sequence mismatch"

    # ---- full sequence, bf16 compute and bf16 output writeback ----------------
    ys16o_pad = jax.block_until_ready(
        rnncell_forward_seq(xs, h0_pad, params_bf16, out_dtype=jnp.bfloat16))
    ys16o = ys16o_pad[:, :, :hidden_dim].astype(jnp.float32)
    assert jnp.allclose(ys16o, ys_ref, atol=3e-2, rtol=3e-2), "bf16-out sequence mismatch"

    print("KERNEL_OK")
</pallas_src>

<mosaic_0001>
module attributes {stable_mosaic.version = 11 : i64} {
  func.func @rnncell_step_kernel(%arg0: memref<8x128xf32, #tpu.memory_space<vmem>>, %arg1: memref<8x128xf32, #tpu.memory_space<vmem>>, %arg2: memref<128x128xf32, #tpu.memory_space<vmem>>, %arg3: memref<128x128xf32, #tpu.memory_space<vmem>>, %arg4: memref<1x128xf32, #tpu.memory_space<vmem>>, %arg5: memref<8x128xf32, #tpu.memory_space<vmem>>) attributes {dimension_semantics = [], scalar_prefetch = 0 : i64, scratch_operands = 0 : i64, tpu.core_type = #tpu.core_type<tc>} {
    %c0 = arith.constant 0 : index
    %c0_0 = arith.constant 0 : index
    %0 = vector.load %arg0[%c0, %c0_0] : memref<8x128xf32, #tpu.memory_space<vmem>>, vector<8x128xf32>
    %c0_1 = arith.constant 0 : index
    %c0_2 = arith.constant 0 : index
    %1 = vector.load %arg2[%c0_1, %c0_2] : memref<128x128xf32, #tpu.memory_space<vmem>>, vector<128x128xf32>
    %cst = arith.constant dense<0.000000e+00> : vector<8x128xf32>
    %2 = tpu.matmul %0, %1, %cst {dimension_numbers = #tpu.dot_dimension_numbers<[1], [0], [0], [1], [0, 0, 1, 1], [], []>} : vector<8x128xf32>, vector<128x128xf32>, vector<8x128xf32> -> vector<8x128xf32>
    %c0_3 = arith.constant 0 : index
    %c0_4 = arith.constant 0 : index
    %3 = vector.load %arg1[%c0_3, %c0_4] : memref<8x128xf32, #tpu.memory_space<vmem>>, vector<8x128xf32>
    %c0_5 = arith.constant 0 : index
    %c0_6 = arith.constant 0 : index
    %4 = vector.load %arg3[%c0_5, %c0_6] : memref<128x128xf32, #tpu.memory_space<vmem>>, vector<128x128xf32>
    %cst_7 = arith.constant dense<0.000000e+00> : vector<8x128xf32>
    %5 = tpu.matmul %3, %4, %cst_7 {dimension_numbers = #tpu.dot_dimension_numbers<[1], [0], [0], [1], [0, 0, 1, 1], [], []>} : vector<8x128xf32>, vector<128x128xf32>, vector<8x128xf32> -> vector<8x128xf32>
    %6 = arith.addf %2, %5 : vector<8x128xf32>
    %c0_8 = arith.constant 0 : index
    %c0_9 = arith.constant 0 : index
    %7 = vector.load %arg4[%c0_8, %c0_9] : memref<1x128xf32, #tpu.memory_space<vmem>>, vector<1x128xf32>
    %8 = vector.broadcast %7 : vector<1x128xf32> to vector<8x128xf32>
    %9 = arith.addf %6, %8 : vector<8x128xf32>
    %10 = math.tanh %9 : vector<8x128xf32>
    %c0_10 = arith.constant 0 : index
    %c0_11 = arith.constant 0 : index
    %11 = vector.load %arg5[%c0_10, %c0_11] : memref<8x128xf32, #tpu.memory_space<vmem>>, vector<8x128xf32>
    tpu.vector_store %arg5[%c0_10, %c0_11], %10 {strides = array<i32>} : memref<8x128xf32, #tpu.memory_space<vmem>>, vector<8x128xf32>,
    return
  }
}

</mosaic_0001>

<llo_original>
// kernel: tpu_custom_call.1
$region0: #{tpu_custom_call.1}
  #allocation0 [shape = 'u32[]', space=smem, size = 0x4, offset = 0x4, fixed_abs, tag = 'smem constant byte address 0x4 - core index']
  #allocation1 [shape = 'u32[144,128]{1,0:T(1,128)}', space=vmem, size = 0x12000, scoped, tag = 'internal scratch']
  %s0 = inlined_call_operand.hbm [shape: f32[8,128], index: 0, kind: input, shape index: {}]
  %s1 = inlined_call_operand.hbm [shape: f32[8,128], index: 1, kind: input, shape index: {}]
  %s2 = inlined_call_operand.hbm [shape: f32[128,128], index: 2, kind: input, shape index: {}]
  %s3 = inlined_call_operand.hbm [shape: f32[128,128], index: 3, kind: input, shape index: {}]
  %s4 = inlined_call_operand.vmem [shape: f32[1,128], index: 4, kind: input, shape index: {}]
  %s5 = inlined_call_operand.hbm [shape: f32[8,128], index: 5, kind: output, shape index: {}]
  %s6 = sld [smem:[#allocation0]]
  $region46: #{tpu_custom_call.1} parent=0
    _
  %s8 = ssub.s32 1, %s6
  %s9 = scalar_select 0, %s8, %s6
  $region1: #{tpu_custom_call.1} parent=0
    #allocation2 [shape = 'u8[4096]{0}', space=vmem, size = 0x1000, scoped, tag = 'input window, operand 0, single buffered']
    #allocation3 [shape = 's32[1]{0}', space=sflag, size = 0x4, scoped, tag = 'scoped memory for tpu_custom_call.1']
    #allocation4 [shape = 's32[1]{0}', space=sflag, size = 0x4, scoped, tag = 'scoped memory for tpu_custom_call.1']
    #allocation5 [shape = 'u8[4096]{0}', space=vmem, size = 0x1000, scoped, tag = 'input window, operand 1, single buffered']
    #allocation6 [shape = 's32[1]{0}', space=sflag, size = 0x4, scoped, tag = 'scoped memory for tpu_custom_call.1']
    #allocation7 [shape = 'u8[65536]{0}', space=vmem, size = 0x10000, scoped, tag = 'input window, operand 2, single buffered']
    #allocation8 [shape = 'u8[65536]{0}', space=vmem, size = 0x10000, scoped, tag = 'input window, operand 3, single buffered']
    #allocation9 [shape = 's32[1]{0}', space=sflag, size = 0x4, scoped, tag = 'scoped memory for tpu_custom_call.1']
    #allocation10 [shape = 'u8[4096]{0}', space=vmem, size = 0x1000, scoped, tag = 'output window, operand 0, single buffered']
    %10 = vsyncpa [#allocation3], 0
    %11 = vsyncpa [#allocation6], 0
    %12 = vsyncpa [#allocation9], 0
    %13 = vsyncpa [#allocation4], 0
    // Predicated region
    $region2: #{tpu_custom_call.1} parent=1 // pred_check
      _
    $region3: #{tpu_custom_call.1} parent=1 // pred_check_branch
      %15 = sbr.rel (0) target = $region5
    $region4: #{tpu_custom_call.1} parent=1 // pred_region
      %s17 = ssub.s32 128, 128
      %18 = vsyncadd [#allocation3], %s17
      %s20 = sshll.u32 [#allocation2], 4
      %s21 = int_to_ptr.vmem [resolvable:$true] %s20
      %23 = dma.hbm_to_vmem [thread:$0]  %s0, 128, %s21, [#allocation3]
    $region5: #{tpu_custom_call.1} parent=1 // pred_fallthru
      _
    // Predicated region
    $region6: #{tpu_custom_call.1} parent=1 // pred_check
      _
    $region7: #{tpu_custom_call.1} parent=1 // pred_check_branch
      %25 = sbr.rel (0) target = $region9
    $region8: #{tpu_custom_call.1} parent=1 // pred_region
      %s27 = ssub.s32 128, 128
      %28 = vsyncadd [#allocation6], %s27
      %s30 = sshll.u32 [#allocation5], 4
      %s31 = int_to_ptr.vmem [resolvable:$true] %s30
      %33 = dma.hbm_to_vmem [thread:$0]  %s1, 128, %s31, [#allocation6]
    $region9: #{tpu_custom_call.1} parent=1 // pred_fallthru
      _
    // Predicated region
    $region10: #{tpu_custom_call.1} parent=1 // pred_check
      _
    $region11: #{tpu_custom_call.1} parent=1 // pred_check_branch
      %35 = sbr.rel (0) target = $region13
    $region12: #{tpu_custom_call.1} parent=1 // pred_region
      %s37 = ssub.s32 2048, 2048
      %38 = vsyncadd [#allocation6], %s37
      %s39 = sshll.u32 [#allocation7], 4
      %s40 = int_to_ptr.vmem [resolvable:$true] %s39
      %45 = dma.hbm_to_vmem [thread:$0]  %s2, 2048, %s40, [#allocation6], 128, 128, 8
    $region13: #{tpu_custom_call.1} parent=1 // pred_fallthru
      _
    // Predicated region
    $region14: #{tpu_custom_call.1} parent=1 // pred_check
      _
    $region15: #{tpu_custom_call.1} parent=1 // pred_check_branch
      %47 = sbr.rel (0) target = $region17
    $region16: #{tpu_custom_call.1} parent=1 // pred_region
      %s49 = ssub.s32 2048, 2048
      %50 = vsyncadd [#allocation9], %s49
      %s51 = sshll.u32 [#allocation8], 4
      %s52 = int_to_ptr.vmem [resolvable:$true] %s51
      %57 = dma.hbm_to_vmem [thread:$0]  %s3, 2048, %s52, [#allocation9], 128, 128, 8
    $region17: #{tpu_custom_call.1} parent=1 // pred_fallthru
      _
    // Predicated region
    $region18: #{tpu_custom_call.1} parent=1 // pred_check
      _
    $region19: #{tpu_custom_call.1} parent=1 // pred_check_branch
      %59 = sbr.rel (0) target = $region21
    $region20: #{tpu_custom_call.1} parent=1 // pred_region
      _
    $region21: #{tpu_custom_call.1} parent=1 // pred_fallthru
      _
    // Predicated region
    $region22: #{tpu_custom_call.1} parent=1 // pred_check
      _
    $region23: #{tpu_custom_call.1} parent=1 // pred_check_branch
      %61 = sbr.rel (0) target = $region25
    $region24: #{tpu_custom_call.1} parent=1 // pred_region
      %62 = dma.done [#allocation3], 128
    $region25: #{tpu_custom_call.1} parent=1 // pred_fallthru
      _
    // Predicated region
    $region26: #{tpu_custom_call.1} parent=1 // pred_check
      _
    $region27: #{tpu_custom_call.1} parent=1 // pred_check_branch
      %64 = sbr.rel (0) target = $region29
    $region28: #{tpu_custom_call.1} parent=1 // pred_region
      %65 = dma.done [#allocation6], 128
    $region29: #{tpu_custom_call.1} parent=1 // pred_fallthru
      _
    // Predicated region
    $region30: #{tpu_custom_call.1} parent=1 // pred_check
      _
    $region31: #{tpu_custom_call.1} parent=1 // pred_check_branch
      %67 = sbr.rel (0) target = $region33
    $region32: #{tpu_custom_call.1} parent=1 // pred_region
      %68 = dma.done [#allocation6], 2048
    $region33: #{tpu_custom_call.1} parent=1 // pred_fallthru
      _
    // Predicated region
    $region34: #{tpu_custom_call.1} parent=1 // pred_check
      _
    $region35: #{tpu_custom_call.1} parent=1 // pred_check_branch
      %70 = sbr.rel (0) target = $region37
    $region36: #{tpu_custom_call.1} parent=1 // pred_region
      %71 = dma.done [#allocation9], 2048
    $region37: #{tpu_custom_call.1} parent=1 // pred_fallthru
      _
    %v72 = vld [vmem:[#allocation2] sm:$0xff]
    %v73 = vld [vmem:[#allocation7] sm:$0xff]
    %v74 = vld [vmem:[#allocation7 + $0x8] sm:$0xff]
    %v75 = vld [vmem:[#allocation7 + $0x10] sm:$0xff]
    %v76 = vld [vmem:[#allocation7 + $0x18] sm:$0xff]
    %v77 = vld [vmem:[#allocation7 + $0x20] sm:$0xff]
    %v78 = vld [vmem:[#allocation7 + $0x28] sm:$0xff]
    %v79 = vld [vmem:[#allocation7 + $0x30] sm:$0xff]
    %v80 = vld [vmem:[#allocation7 + $0x38] sm:$0xff]
    %v81 = vld [vmem:[#allocation7 + $0x40] sm:$0xff]
    %v82 = vld [vmem:[#allocation7 + $0x48] sm:$0xff]
    %v83 = vld [vmem:[#allocation7 + $0x50] sm:$0xff]
    %v84 = vld [vmem:[#allocation7 + $0x58] sm:$0xff]
    %v85 = vld [vmem:[#allocation7 + $0x60] sm:$0xff]
    %v86 = vld [vmem:[#allocation7 + $0x68] sm:$0xff]
    %v87 = vld [vmem:[#allocation7 + $0x70] sm:$0xff]
    %v88 = vld [vmem:[#allocation7 + $0x78] sm:$0xff]
    %v89 = vld [vmem:[#allocation5] sm:$0xff]
    %v90 = vld [vmem:[#allocation8] sm:$0xff]
    %v91 = vld [vmem:[#allocation8 + $0x8] sm:$0xff]
    %v92 = vld [vmem:[#allocation8 + $0x10] sm:$0xff]
    %v93 = vld [vmem:[#allocation8 + $0x18] sm:$0xff]
    %v94 = vld [vmem:[#allocation8 + $0x20] sm:$0xff]
    %v95 = vld [vmem:[#allocation8 + $0x28] sm:$0xff]
    %v96 = vld [vmem:[#allocation8 + $0x30] sm:$0xff]
    %v97 = vld [vmem:[#allocation8 + $0x38] sm:$0xff]
    %v98 = vld [vmem:[#allocation8 + $0x40] sm:$0xff]
    %v99 = vld [vmem:[#allocation8 + $0x48] sm:$0xff]
    %v100 = vld [vmem:[#allocation8 + $0x50] sm:$0xff]
    %v101 = vld [vmem:[#allocation8 + $0x58] sm:$0xff]
    %v102 = vld [vmem:[#allocation8 + $0x60] sm:$0xff]
    %v103 = vld [vmem:[#allocation8 + $0x68] sm:$0xff]
    %v104 = vld [vmem:[#allocation8 + $0x70] sm:$0xff]
    %v105 = vld [vmem:[#allocation8 + $0x78] sm:$0xff]
    %106 = vmatprep.subr.mxu0 0.0
    %107 = vmatpush1.msra.mxu0 %v90
    %108 = vmatprep.subr.mxu0 0.0
    %109 = vmatpush1.msra.mxu0 %v91
    %110 = vmatprep.subr.mxu0 0.0
    %111 = vmatpush1.msra.mxu0 %v92
    %112 = vmatprep.subr.mxu0 0.0
    %113 = vmatpush1.msra.mxu0 %v93
    %114 = vmatprep.subr.mxu0 0.0
    %115 = vmatpush1.msra.mxu0 %v94
    %116 = vmatprep.subr.mxu0 0.0
    %117 = vmatpush1.msra.mxu0 %v95
    %118 = vmatprep.subr.mxu0 0.0
    %119 = vmatpush1.msra.mxu0 %v96
    %120 = vmatprep.subr.mxu0 0.0
    %121 = vmatpush1.msra.mxu0 %v97
    %122 = vmatprep.subr.mxu0 0.0
    %123 = vmatpush1.msra.mxu0 %v98
    %124 = vmatprep.subr.mxu0 0.0
    %125 = vmatpush1.msra.mxu0 %v99
    %126 = vmatprep.subr.mxu0 0.0
    %127 = vmatpush1.msra.mxu0 %v100
    %128 = vmatprep.subr.mxu0 0.0
    %129 = vmatpush1.msra.mxu0 %v101
    %130 = vmatprep.subr.mxu0 0.0
    %131 = vmatpush1.msra.mxu0 %v102
    %132 = vmatprep.subr.mxu0 0.0
    %133 = vmatpush1.msra.mxu0 %v103
    %134 = vmatprep.subr.mxu0 0.0
    %135 = vmatpush1.msra.mxu0 %v104
    %136 = vmatprep.subr.mxu0 0.0
    %137 = vmatpush1.msra.mxu0 %v105
    %138 = vmatprep.subr.mxu0 0.0
    %139 = vmatpush1.msra.mxu0 0.0
    %140 = vmatprep.subr.mxu0 0.0
    %141 = vmatpush1.msra.mxu0 0.0
    %142 = vmatprep.subr.mxu0 0.0
    %143 = vmatpush1.msra.mxu0 0.0
    %144 = vmatprep.subr.mxu0 0.0
    %145 = vmatpush1.msra.mxu0 0.0
    %146 = vmatprep.subr.mxu0 0.0
    %147 = vmatpush1.msra.mxu0 0.0
    %148 = vmatprep.subr.mxu0 0.0
    %149 = vmatpush1.msra.mxu0 0.0
    %150 = vmatprep.subr.mxu0 0.0
    %151 = vmatpush1.msra.mxu0 0.0
    %152 = vmatprep.subr.mxu0 0.0
    %153 = vmatpush1.msra.mxu0 0.0
    %154 = vmatprep.subr.mxu0 0.0
    %155 = vmatpush1.msra.mxu0 0.0
    %156 = vmatprep.subr.mxu0 0.0
    %157 = vmatpush1.msra.mxu0 0.0
    %158 = vmatprep.subr.mxu0 0.0
    %159 = vmatpush1.msra.mxu0 0.0
    %160 = vmatprep.subr.mxu0 0.0
    %161 = vmatpush1.msra.mxu0 0.0
    %162 = vmatprep.subr.mxu0 0.0
    %163 = vmatpush1.msra.mxu0 0.0
    %164 = vmatprep.subr.mxu0 0.0
    %165 = vmatpush1.msra.mxu0 0.0
    %166 = vmatprep.subr.mxu0 0.0
    %167 = vmatpush1.msra.mxu0 0.0
    %168 = vmatprep.subr.mxu0 0.0
    %169 = vmatpush1.msra.mxu0 0.0
    %170 = vmatprep.mubr.f32.mxu0 0.0
    %171 = vmatmul.mubr.f32.gmra.mrb[0].mxu0 %v89
    %v172 = vpop.f32.mrb[0].mxu0
    %v173 = vadd.f32 0.0, %v172
    %v174 = vpop.f32.mrb[0].mxu0
    %175 = vdwg.mxu0
    %176 = vmatprep.subr.mxu0 0.0
    %177 = vmatpush1.msra.mxu0 %v73
    %178 = vmatprep.subr.mxu0 0.0
    %179 = vmatpush1.msra.mxu0 %v74
    %180 = vmatprep.subr.mxu0 0.0
    %181 = vmatpush1.msra.mxu0 %v75
    %182 = vmatprep.subr.mxu0 0.0
    %183 = vmatpush1.msra.mxu0 %v76
    %184 = vmatprep.subr.mxu0 0.0
    %185 = vmatpush1.msra.mxu0 %v77
    %186 = vmatprep.subr.mxu0 0.0
    %187 = vmatpush1.msra.mxu0 %v78
    %188 = vmatprep.subr.mxu0 0.0
    %189 = vmatpush1.msra.mxu0 %v79
    %190 = vmatprep.subr.mxu0 0.0
    %191 = vmatpush1.msra.mxu0 %v80
    %192 = vmatprep.subr.mxu0 0.0
    %193 = vmatpush1.msra.mxu0 %v81
    %194 = vmatprep.subr.mxu0 0.0
    %195 = vmatpush1.msra.mxu0 %v82
    %196 = vmatprep.subr.mxu0 0.0
    %197 = vmatpush1.msra.mxu0 %v83
    %198 = vmatprep.subr.mxu0 0.0
    %199 = vmatpush1.msra.mxu0 %v84
    %200 = vmatprep.subr.mxu0 0.0
    %201 = vmatpush1.msra.mxu0 %v85
    %202 = vmatprep.subr.mxu0 0.0
    %203 = vmatpush1.msra.mxu0 %v86
    %204 = vmatprep.subr.mxu0 0.0
    %205 = vmatpush1.msra.mxu0 %v87
    %206 = vmatprep.subr.mxu0 0.0
    %207 = vmatpush1.msra.mxu0 %v88
    %208 = vmatprep.subr.mxu0 0.0
    %209 = vmatpush1.msra.mxu0 0.0
    %210 = vmatprep.subr.mxu0 0.0
    %211 = vmatpush1.msra.mxu0 0.0
    %212 = vmatprep.subr.mxu0 0.0
    %213 = vmatpush1.msra.mxu0 0.0
    %214 = vmatprep.subr.mxu0 0.0
    %215 = vmatpush1.msra.mxu0 0.0
    %216 = vmatprep.subr.mxu0 0.0
    %217 = vmatpush1.msra.mxu0 0.0
    %218 = vmatprep.subr.mxu0 0.0
    %219 = vmatpush1.msra.mxu0 0.0
    %220 = vmatprep.subr.mxu0 0.0
    %221 = vmatpush1.msra.mxu0 0.0
    %222 = vmatprep.subr.mxu0 0.0
    %223 = vmatpush1.msra.mxu0 0.0
    %224 = vmatprep.subr.mxu0 0.0
    %225 = vmatpush1.msra.mxu0 0.0
    %226 = vmatprep.subr.mxu0 0.0
    %227 = vmatpush1.msra.mxu0 0.0
    %228 = vmatprep.subr.mxu0 0.0
    %229 = vmatpush1.msra.mxu0 0.0
    %230 = vmatprep.subr.mxu0 0.0
    %231 = vmatpush1.msra.mxu0 0.0
    %232 = vmatprep.subr.mxu0 0.0
    %233 = vmatpush1.msra.mxu0 0.0
    %234 = vmatprep.subr.mxu0 0.0
    %235 = vmatpush1.msra.mxu0 0.0
    %236 = vmatprep.subr.mxu0 0.0
    %237 = vmatpush1.msra.mxu0 0.0
    %238 = vmatprep.subr.mxu0 0.0
    %239 = vmatpush1.msra.mxu0 0.0
    %240 = vmatprep.mubr.f32.mxu0 0.0
    %241 = vmatmul.mubr.f32.gmra.mrb[0].mxu0 %v72
    %v242 = vpop.f32.mrb[0].mxu0
    %v243 = vadd.f32 %v173, %v242
    %v244 = vpop.f32.mrb[0].mxu0
    %245 = vdwg.mxu0
    %v246 = vld [vmem:[%s4] sm:$0x1]
    %v248 = vlaneseq
    %v249 = vshrl.u32 %v248, 7
    %v250 = vsub.s32 0, %v249
    %v251 = vrot.slane %v246, %v250
    %v253 = vadd.f32 %v243, %v251
    %v254 = vtanh.pop %v253
    %255 = vst [vmem:[#allocation10] sm:$0xff] %v254
    // Predicated region
    $region38: #{tpu_custom_call.1} parent=1 // pred_check
      _
    $region39: #{tpu_custom_call.1} parent=1 // pred_check_branch
      %257 = sbr.rel (0) target = $region41
    $region40: #{tpu_custom_call.1} parent=1 // pred_region
      %s259 = ssub.s32 128, 128
      %260 = vsyncadd [#allocation4], %s259
      %s262 = sshll.u32 [#allocation10], 4
      %s263 = int_to_ptr.vmem [resolvable:$true] %s262
      %265 = dma.vmem_to_hbm [thread:$0]  %s263, 128, %s5, [#allocation4]
    $region41: #{tpu_custom_call.1} parent=1 // pred_fallthru
      _
    // Predicated region
    $region42: #{tpu_custom_call.1} parent=1 // pred_check
      _
    $region43: #{tpu_custom_call.1} parent=1 // pred_check_branch
      %267 = sbr.rel (0) target = $region45
    $region44: #{tpu_custom_call.1} parent=1 // pred_region
      %268 = dma.done [#allocation4], 128
    $region45: #{tpu_custom_call.1} parent=1 // pred_fallthru
      _
    %269 = vsyncpa [#allocation3], 1
    %270 = vsyncpa [#allocation6], 1
    %271 = vsyncpa [#allocation9], 1
    %272 = vsyncpa [#allocation4], 1

</llo_original>
